<compile_context>
chip_gen: v5e
topology: v5e:2x2
jax: 0.10.0
libtpu: 0.0.40
codegen_flags: <defaults>
</compile_context>

<pallas_src>
import functools

import jax
import jax.numpy as jnp
from jax.experimental import pallas as pl
from jax.experimental.pallas import tpu as pltpu


# --------------------------------- kernel --------------------------------- #

def _qnet_kernel(s_ref, a_ref, w_ref, out_ref, *,
                 s_rows, a_rows, h2, off_w2, off_w3, off_b):
    f32 = jnp.float32
    bf16 = jnp.bfloat16

    # ---- layer 1: split-K over [state | action], W1|W4 fused -> [B, 2H] ----
    # (split-K removes the wrapper-side concat and its extra HBM round trip)
    s = s_ref[...].astype(bf16)
    a = a_ref[...].astype(bf16)
    w1s = w_ref[0:s_rows, :]                         # [S, 2H]  bf16
    w1a = w_ref[s_rows:s_rows + a_rows, :]           # [A, 2H]  bf16
    b1 = w_ref[off_b:off_b + 1, :].astype(f32)       # [1, 2H]  = [b1 | b4]
    h = (jnp.dot(s, w1s, preferred_element_type=f32)
         + jnp.dot(a, w1a, preferred_element_type=f32)
         + b1)
    h = jnp.maximum(h, 0.0)                          # f32 VPU (v5e-safe)

    # ---- layer 2: block-diagonal W2 ⊕ W5, one MXU push, branches stay
    # independent (zero half is free: cost is fill/drain, not MACs) ----------
    w2 = w_ref[off_w2:off_w2 + h2, :]                # [2H, 2H] bf16
    b2 = w_ref[off_b + 1:off_b + 2, :].astype(f32)   # [1, 2H]  = [b2 | b5]
    h = jnp.dot(h.astype(bf16), w2, preferred_element_type=f32) + b2
    h = jnp.maximum(h, 0.0)

    # ---- layer 3 on the VPU + XLU (N=2 MXU push would be ~98% idle and sits
    # on the serial critical path) -------------------------------------------
    w3 = w_ref[off_w3:off_w3 + 1, :].astype(f32)     # [1, 2H] = [w3col | w6col]
    prod = h * w3                                    # [B, 2H] elementwise (VPU)
    half = h2 // 2
    q1 = jnp.sum(prod[:, :half], axis=1, keepdims=True)   # [B, 1]
    q2 = jnp.sum(prod[:, half:], axis=1, keepdims=True)   # [B, 1]
    b3 = w_ref[off_b + 2:off_b + 3, 0:2].astype(f32)      # [1, 2] = (b3, b6)

    # single lane-contiguous [B, 2] store: columns are (q1, q2)
    out_ref[...] = (jnp.concatenate([q1, q2], axis=1) + b3).astype(out_ref.dtype)


# ----------------------------- param packing ------------------------------ #

def pack_qnetwork_params(params, state_dim, num_actions, hidden_dim):
    """Pack the 12 torch-layout tensors into ONE bf16 [rows, 2H] slab (offline).

    Slab row layout (width = 2H):
      [0, S)              W1 | W4 rows for the state part of the input
      [S, S+A)            W1 | W4 rows for the action part of the input
      [S+A, S+A+2H)       block-diagonal W2 ⊕ W5
      [S+A+2H]            final-layer row  [w3 column | w6 column]
      [S+A+2H+1 .. +3]    bias rows  [b1|b4], [b2|b5], [b3, b6, 0...]
      (zero-padded to a multiple of 8 rows)
    """
    S, A, H = state_dim, num_actions, hidden_dim
    H2 = 2 * H

    w1 = jnp.concatenate([params["w1"], params["w4"]], axis=1)        # [S+A, 2H]
    zHH = jnp.zeros((H, H), jnp.float32)
    w2 = jnp.block([[params["w2"], zHH], [zHH, params["w5"]]])        # [2H, 2H]
    w3row = jnp.concatenate([params["w3"][:, 0],
                             params["w6"][:, 0]])[None, :]            # [1, 2H]

    b_rows = jnp.zeros((3, H2), jnp.float32)
    b_rows = b_rows.at[0].set(jnp.concatenate([params["b1"][0], params["b4"][0]]))
    b_rows = b_rows.at[1].set(jnp.concatenate([params["b2"][0], params["b5"][0]]))
    b_rows = b_rows.at[2, 0].set(params["b3"][0, 0])
    b_rows = b_rows.at[2, 1].set(params["b6"][0, 0])

    rows = S + A + H2 + 1 + 3
    rows_padded = -(-rows // 8) * 8
    pad = jnp.zeros((rows_padded - rows, H2), jnp.float32)
    slab = jnp.concatenate([w1, w2, w3row, b_rows, pad], axis=0)      # [rows_p, 2H]

    offsets = dict(s_rows=S, a_rows=A, h2=H2,
                   off_w2=S + A, off_w3=S + A + H2, off_b=S + A + H2 + 1)
    return slab.astype(jnp.bfloat16), offsets


# --------------------------------- wrapper --------------------------------- #

def qnetwork_forward(state, action, slab, offsets):
    """Fused twin-Q forward.  Returns one [B, 2] slab: column 0 = q1, 1 = q2.

    state:  [B, state_dim]   f32
    action: [B, num_actions] f32
    slab:   packed bf16 parameter slab from pack_qnetwork_params
    """
    B = state.shape[0]
    kernel = functools.partial(_qnet_kernel, **offsets)
    vmem = pl.BlockSpec(memory_space=pltpu.MemorySpace.VMEM)
    return pl.pallas_call(
        kernel,
        out_shape=jax.ShapeDtypeStruct((B, 2), jnp.float32),
        in_specs=[vmem, vmem, vmem],
        out_specs=vmem,
    )(state, action, slab)


def qnetwork_forward_tuple(state, action, slab, offsets):
    """Torch-API-compatible wrapper: returns (q1, q2), each [B, 1]."""
    q = qnetwork_forward(state, action, slab, offsets)
    return q[:, 0:1], q[:, 1:2]


# ----------------------- init + pure-JAX reference ------------------------ #

def xavier_uniform(key, fan_in, fan_out, dtype=jnp.float32):
    # torch.nn.init.xavier_uniform_ with gain=1
    bound = (6.0 / (fan_in + fan_out)) ** 0.5
    return jax.random.uniform(key, (fan_in, fan_out), dtype=dtype,
                              minval=-bound, maxval=bound)


def init_qnetwork_params(key, state_dim, num_actions, hidden_dim):
    in_dim = state_dim + num_actions
    keys = jax.random.split(key, 6)
    return {
        "w1": xavier_uniform(keys[0], in_dim, hidden_dim),
        "b1": jnp.zeros((1, hidden_dim), jnp.float32),
        "w2": xavier_uniform(keys[1], hidden_dim, hidden_dim),
        "b2": jnp.zeros((1, hidden_dim), jnp.float32),
        "w3": xavier_uniform(keys[2], hidden_dim, 1),
        "b3": jnp.zeros((1, 1), jnp.float32),
        "w4": xavier_uniform(keys[3], in_dim, hidden_dim),
        "b4": jnp.zeros((1, hidden_dim), jnp.float32),
        "w5": xavier_uniform(keys[4], hidden_dim, hidden_dim),
        "b5": jnp.zeros((1, hidden_dim), jnp.float32),
        "w6": xavier_uniform(keys[5], hidden_dim, 1),
        "b6": jnp.zeros((1, 1), jnp.float32),
    }


def qnetwork_reference(state, action, params):
    """Pure-JAX f32 reference mirroring the original torch module exactly."""
    xu = jnp.concatenate([state, action], axis=1)
    h = jax.nn.relu(xu @ params["w1"] + params["b1"])
    h = jax.nn.relu(h @ params["w2"] + params["b2"])
    q1 = h @ params["w3"] + params["b3"]
    g = jax.nn.relu(xu @ params["w4"] + params["b4"])
    g = jax.nn.relu(g @ params["w5"] + params["b5"])
    q2 = g @ params["w6"] + params["b6"]
    return q1, q2


if __name__ == "__main__":
    state_dim, num_actions, hidden_dim = 12, 4, 32
    batch = 8

    key = jax.random.PRNGKey(0)
    k_params, k_state, k_action, k_b = jax.random.split(key, 4)

    params = init_qnetwork_params(k_params, state_dim, num_actions, hidden_dim)
    # Perturb biases to non-zero values so the bias-packing path is exercised
    # (the torch init zeros them, which would hide packing bugs).
    kb = jax.random.split(k_b, 6)
    params["b1"] = 0.1 * jax.random.normal(kb[0], (1, hidden_dim), jnp.float32)
    params["b2"] = 0.1 * jax.random.normal(kb[1], (1, hidden_dim), jnp.float32)
    params["b3"] = 0.1 * jax.random.normal(kb[2], (1, 1), jnp.float32)
    params["b4"] = 0.1 * jax.random.normal(kb[3], (1, hidden_dim), jnp.float32)
    params["b5"] = 0.1 * jax.random.normal(kb[4], (1, hidden_dim), jnp.float32)
    params["b6"] = 0.1 * jax.random.normal(kb[5], (1, 1), jnp.float32)

    slab, offsets = pack_qnetwork_params(params, state_dim, num_actions, hidden_dim)

    state = jax.random.normal(k_state, (batch, state_dim), jnp.float32)
    action = jax.random.normal(k_action, (batch, num_actions), jnp.float32)

    q = qnetwork_forward(state, action, slab, offsets)       # [B, 2] slab
    q1, q2 = qnetwork_forward_tuple(state, action, slab, offsets)
    jax.block_until_ready((q, q1, q2))

    q1_ref, q2_ref = qnetwork_reference(state, action, params)
    assert q.shape == (batch, 2)
    assert q1.shape == (batch, 1) and q2.shape == (batch, 1)
    # bf16 MXU operands vs f32 reference -> loosened (deliberate) tolerance.
    assert jnp.allclose(q[:, 0:1], q1_ref, atol=5e-2, rtol=2e-2)
    assert jnp.allclose(q[:, 1:2], q2_ref, atol=5e-2, rtol=2e-2)
    assert jnp.allclose(q1, q1_ref, atol=5e-2, rtol=2e-2)
    assert jnp.allclose(q2, q2_ref, atol=5e-2, rtol=2e-2)

    print("KERNEL_OK")
</pallas_src>

<mosaic_0001>
module attributes {stable_mosaic.version = 11 : i64} {
  func.func @_qnet_kernel(%arg0: memref<8x12xf32, #tpu.memory_space<vmem>>, %arg1: memref<8x4xf32, #tpu.memory_space<vmem>>, %arg2: memref<88x64xbf16, #tpu.memory_space<vmem>>, %arg3: memref<8x2xf32, #tpu.memory_space<vmem>>) attributes {dimension_semantics = [], scalar_prefetch = 0 : i64, scratch_operands = 0 : i64, tpu.core_type = #tpu.core_type<tc>} {
    %c0 = arith.constant 0 : index
    %c0_0 = arith.constant 0 : index
    %0 = vector.load %arg0[%c0, %c0_0] : memref<8x12xf32, #tpu.memory_space<vmem>>, vector<8x12xf32>
    %1 = arith.truncf %0 : vector<8x12xf32> to vector<8x12xbf16>
    %c0_1 = arith.constant 0 : index
    %c0_2 = arith.constant 0 : index
    %2 = vector.load %arg1[%c0_1, %c0_2] : memref<8x4xf32, #tpu.memory_space<vmem>>, vector<8x4xf32>
    %3 = arith.truncf %2 : vector<8x4xf32> to vector<8x4xbf16>
    %c0_3 = arith.constant 0 : index
    %c0_4 = arith.constant 0 : index
    %4 = vector.load %arg2[%c0_3, %c0_4] : memref<88x64xbf16, #tpu.memory_space<vmem>>, vector<12x64xbf16>
    %c12 = arith.constant 12 : index
    %c0_5 = arith.constant 0 : index
    %5 = vector.load %arg2[%c12, %c0_5] : memref<88x64xbf16, #tpu.memory_space<vmem>>, vector<4x64xbf16>
    %c81 = arith.constant 81 : index
    %c0_6 = arith.constant 0 : index
    %6 = vector.load %arg2[%c81, %c0_6] : memref<88x64xbf16, #tpu.memory_space<vmem>>, vector<1x64xbf16>
    %7 = arith.extf %6 : vector<1x64xbf16> to vector<1x64xf32>
    %cst = arith.constant dense<0.000000e+00> : vector<8x64xf32>
    %8 = tpu.matmul %1, %4, %cst {dimension_numbers = #tpu.dot_dimension_numbers<[1], [0], [0], [1], [0, 0, 1, 1], [], []>} : vector<8x12xbf16>, vector<12x64xbf16>, vector<8x64xf32> -> vector<8x64xf32>
    %cst_7 = arith.constant dense<0.000000e+00> : vector<8x64xf32>
    %9 = tpu.matmul %3, %5, %cst_7 {dimension_numbers = #tpu.dot_dimension_numbers<[1], [0], [0], [1], [0, 0, 1, 1], [], []>} : vector<8x4xbf16>, vector<4x64xbf16>, vector<8x64xf32> -> vector<8x64xf32>
    %10 = arith.addf %8, %9 : vector<8x64xf32>
    %11 = vector.broadcast %7 : vector<1x64xf32> to vector<8x64xf32>
    %12 = arith.addf %10, %11 : vector<8x64xf32>
    %cst_8 = arith.constant 0.000000e+00 : f32
    %13 = vector.broadcast %cst_8 : f32 to vector<8x64xf32>
    %14 = arith.maximumf %12, %13 : vector<8x64xf32>
    %c16 = arith.constant 16 : index
    %c0_9 = arith.constant 0 : index
    %15 = vector.load %arg2[%c16, %c0_9] : memref<88x64xbf16, #tpu.memory_space<vmem>>, vector<64x64xbf16>
    %c82 = arith.constant 82 : index
    %c0_10 = arith.constant 0 : index
    %16 = vector.load %arg2[%c82, %c0_10] : memref<88x64xbf16, #tpu.memory_space<vmem>>, vector<1x64xbf16>
    %17 = arith.extf %16 : vector<1x64xbf16> to vector<1x64xf32>
    %18 = arith.truncf %14 : vector<8x64xf32> to vector<8x64xbf16>
    %cst_11 = arith.constant dense<0.000000e+00> : vector<8x64xf32>
    %19 = tpu.matmul %18, %15, %cst_11 {dimension_numbers = #tpu.dot_dimension_numbers<[1], [0], [0], [1], [0, 0, 1, 1], [], []>} : vector<8x64xbf16>, vector<64x64xbf16>, vector<8x64xf32> -> vector<8x64xf32>
    %20 = vector.broadcast %17 : vector<1x64xf32> to vector<8x64xf32>
    %21 = arith.addf %19, %20 : vector<8x64xf32>
    %cst_12 = arith.constant 0.000000e+00 : f32
    %22 = vector.broadcast %cst_12 : f32 to vector<8x64xf32>
    %23 = arith.maximumf %21, %22 : vector<8x64xf32>
    %c80 = arith.constant 80 : index
    %c0_13 = arith.constant 0 : index
    %24 = vector.load %arg2[%c80, %c0_13] : memref<88x64xbf16, #tpu.memory_space<vmem>>, vector<1x64xbf16>
    %25 = arith.extf %24 : vector<1x64xbf16> to vector<1x64xf32>
    %26 = vector.broadcast %25 : vector<1x64xf32> to vector<8x64xf32>
    %27 = arith.mulf %23, %26 : vector<8x64xf32>
    %28 = vector.extract_strided_slice %27 {offsets = [0, 0], sizes = [8, 32], strides = [1, 1]} : vector<8x64xf32> to vector<8x32xf32>
    %cst_14 = arith.constant dense<0.000000e+00> : vector<8xf32>
    %29 = vector.multi_reduction <add>, %28, %cst_14 [1] : vector<8x32xf32> to vector<8xf32>
    %30 = vector.shape_cast %29 : vector<8xf32> to vector<8x1xf32>
    %31 = vector.extract_strided_slice %27 {offsets = [0, 32], sizes = [8, 32], strides = [1, 1]} : vector<8x64xf32> to vector<8x32xf32>
    %cst_15 = arith.constant dense<0.000000e+00> : vector<8xf32>
    %32 = vector.multi_reduction <add>, %31, %cst_15 [1] : vector<8x32xf32> to vector<8xf32>
    %33 = vector.shape_cast %32 : vector<8xf32> to vector<8x1xf32>
    %c83 = arith.constant 83 : index
    %c0_16 = arith.constant 0 : index
    %34 = vector.load %arg2[%c83, %c0_16] : memref<88x64xbf16, #tpu.memory_space<vmem>>, vector<1x2xbf16>
    %35 = arith.extf %34 : vector<1x2xbf16> to vector<1x2xf32>
    %36 = tpu.concatenate %30, %33 in 1 : vector<8x1xf32>, vector<8x1xf32> -> vector<8x2xf32>
    %37 = vector.broadcast %35 : vector<1x2xf32> to vector<8x2xf32>
    %38 = arith.addf %36, %37 : vector<8x2xf32>
    %c0_17 = arith.constant 0 : index
    %c0_18 = arith.constant 0 : index
    %39 = vector.load %arg3[%c0_17, %c0_18] : memref<8x2xf32, #tpu.memory_space<vmem>>, vector<8x2xf32>
    tpu.vector_store %arg3[%c0_17, %c0_18], %38 {strides = array<i32>} : memref<8x2xf32, #tpu.memory_space<vmem>>, vector<8x2xf32>,
    return
  }
}

</mosaic_0001>

<llo_original>
// kernel: tpu_custom_call.1
$region0: #{tpu_custom_call.1}
  #allocation0 [shape = 'u32[]', space=smem, size = 0x4, offset = 0x4, fixed_abs, tag = 'smem constant byte address 0x4 - core index']
  #allocation1 [shape = 'u32[72,128]{1,0:T(1,128)}', space=vmem, size = 0x9000, scoped, tag = 'internal scratch']
  %s0 = inlined_call_operand.vmem [shape: f32[8,12], index: 0, kind: input, shape index: {}]
  %s1 = inlined_call_operand.vmem [shape: f32[8,4], index: 1, kind: input, shape index: {}]
  %s2 = inlined_call_operand.vmem [shape: bf16[88,64], index: 2, kind: input, shape index: {}]
  %s3 = inlined_call_operand.vmem [shape: f32[8,2], index: 3, kind: output, shape index: {}]
  %s4 = sld [smem:[#allocation0]]
  $region22: #{tpu_custom_call.1} parent=0
    _
  %s6 = ssub.s32 1, %s4
  %s7 = scalar_select 0, %s6, %s4
  // Predicated region
  $region2: #{tpu_custom_call.1} parent=0 // pred_check
    _
  $region3: #{tpu_custom_call.1} parent=0 // pred_check_branch
    %9 = sbr.rel (0) target = $region5
  $region4: #{tpu_custom_call.1} parent=0 // pred_region
    _
  $region5: #{tpu_custom_call.1} parent=0 // pred_fallthru
    _
  // Predicated region
  $region6: #{tpu_custom_call.1} parent=0 // pred_check
    _
  $region7: #{tpu_custom_call.1} parent=0 // pred_check_branch
    %11 = sbr.rel (0) target = $region9
  $region8: #{tpu_custom_call.1} parent=0 // pred_region
    _
  $region9: #{tpu_custom_call.1} parent=0 // pred_fallthru
    _
  // Predicated region
  $region10: #{tpu_custom_call.1} parent=0 // pred_check
    _
  $region11: #{tpu_custom_call.1} parent=0 // pred_check_branch
    %13 = sbr.rel (0) target = $region13
  $region12: #{tpu_custom_call.1} parent=0 // pred_region
    _
  $region13: #{tpu_custom_call.1} parent=0 // pred_fallthru
    _
  %v15 = vld [vmem:[%s0] sm:$0xff]
  %v16 = vpack.c.bf16 %v15, %v15
  %v17 = vld [vmem:[%s1] sm:$0xff]
  %v18 = vpack.c.bf16 %v17, %v17
  %v19 = vld [vmem:[%s2] sm:$0xf]
  %v20 = vld [vmem:[%s2 + $0x4] sm:$0x3]
  %v21 = vld [vmem:[%s2 + $0x4] sm:$0xc]
  %v22 = vld [vmem:[%s2 + $0x28] sm:$0x1]
  %v23 = vunpack.c.l.bf16 %v22
  %v25 = vunpack.c.l.b16 %v21
  %v26 = vpack.c.b16 %v25, %v25
  %v27 = vrot.slane %v26, 2
  %vm28 = vcmask 31744
  %v30 = vsel %vm28, %v18, 0
  %vm32 = vcmask 1041408
  %v34 = vsel %vm32, %v27, 0
  %36 = vmatpush.bf16.msra.mxu0 0
  %37 = vmatpush.bf16.msra.mxu0 0
  %38 = vmatpush.bf16.msra.mxu0 0
  %39 = vmatpush.bf16.msra.mxu0 0
  %40 = vmatpush.bf16.msra.mxu0 0
  %41 = vmatpush.bf16.msra.mxu0 0
  %42 = vmatpush.bf16.msra.mxu0 0
  %43 = vmatpush.bf16.msra.mxu0 %v34
  %44 = vmatmul.bf16.gmra.mxu0 %v30
  %v45 = vpop.f32.mrf.mxu0
  %v46 = vadd.f32 0.0, %v45
  %v47 = vpop.f32.mrf.mxu0
  %48 = vdwg.mxu0
  %v51 = vunpack.c.l.b16 %v19
  %v52 = vunpack.c.l.b16 %v20
  %v53 = vpack.c.b16 %v52, %v51
  %vm54 = vcmask 97280
  %v56 = vsel %vm54, %v16, 0
  %vm58 = vcmask 1045504
  %v60 = vsel %vm58, %v53, 0
  %62 = vmatpush.bf16.msra.mxu0 0
  %63 = vmatpush.bf16.msra.mxu0 0
  %64 = vmatpush.bf16.msra.mxu0 0
  %65 = vmatpush.bf16.msra.mxu0 0
  %66 = vmatpush.bf16.msra.mxu0 0
  %67 = vmatpush.bf16.msra.mxu0 0
  %68 = vmatpush.bf16.msra.mxu0 0
  %69 = vmatpush.bf16.msra.mxu0 %v60
  %70 = vmatmul.bf16.gmra.mxu0 %v56
  %v71 = vpop.f32.mrf.mxu0
  %v72 = vadd.f32 %v46, %v71
  %v73 = vpop.f32.mrf.mxu0
  %74 = vdwg.mxu0
  %v75 = vperm.slane %v23, 1
  %v76 = vadd.f32 %v72, %v75
  %v77 = vmax.f32 %v76, 0.0
  %v78 = vld [vmem:[%s2 + $0x8] sm:$0xf]
  %v79 = vld [vmem:[%s2 + $0xc] sm:$0xf]
  %v80 = vld [vmem:[%s2 + $0x10] sm:$0xf]
  %v81 = vld [vmem:[%s2 + $0x14] sm:$0xf]
  %v82 = vld [vmem:[%s2 + $0x18] sm:$0xf]
  %v83 = vld [vmem:[%s2 + $0x1c] sm:$0xf]
  %v84 = vld [vmem:[%s2 + $0x20] sm:$0xf]
  %v85 = vld [vmem:[%s2 + $0x24] sm:$0xf]
  %v86 = vld [vmem:[%s2 + $0x28] sm:$0x2]
  %v87 = vunpack.c.l.bf16 %v86
  %v88 = vpack.c.bf16 %v77, %v77
  %v89 = vperm.slane %v87, 2
  %v98 = vunpack.c.l.b16 %v78
  %v99 = vunpack.c.l.b16 %v79
  %v100 = vunpack.c.l.b16 %v80
  %v101 = vunpack.c.l.b16 %v81
  %v102 = vunpack.c.l.b16 %v82
  %v103 = vunpack.c.l.b16 %v83
  %v104 = vunpack.c.l.b16 %v84
  %v105 = vunpack.c.l.b16 %v85
  %v106 = vpack.c.b16 %v99, %v98
  %v107 = vpack.c.b16 %v101, %v100
  %v108 = vpack.c.b16 %v103, %v102
  %v109 = vpack.c.b16 %v105, %v104
  %vm114 = vcmask 523264
  %v116 = vsel %vm114, %v88, 0
  %118 = vmatpush.bf16.msra.mxu0 0
  %119 = vmatpush.bf16.msra.mxu0 0
  %120 = vmatpush.bf16.msra.mxu0 0
  %121 = vmatpush.bf16.msra.mxu0 0
  %122 = vmatpush.bf16.msra.mxu0 %v109
  %123 = vmatpush.bf16.msra.mxu0 %v108
  %124 = vmatpush.bf16.msra.mxu0 %v107
  %125 = vmatpush.bf16.msra.mxu0 %v106
  %126 = vmatmul.bf16.gmra.mxu0 %v116
  %v127 = vpop.f32.mrf.mxu0
  %v128 = vadd.f32 %v89, %v127
  %v129 = vpop.f32.mrf.mxu0
  %130 = vdwg.mxu0
  %v131 = vmax.f32 %v128, 0.0
  %v132 = vperm.slane %v23, 0
  %v133 = vmul.f32 %v131, %v132
  %vm134 = vcmask 261120
  %v135 = vsel %vm134, %v133, 0.0
  %136 = vadd.xlane.f32.xlu0 %v135
  %v137 = vpop.xlane.xlu0 %136
  %139 = vrot.lane.b32.xlu0 %v133, 96
  %v140 = vpop.permute.xlu0 %139
  %v142 = vsel %vm134, %v140, 0.0
  %143 = vadd.xlane.f32.xlu0 %v142
  %v144 = vpop.xlane.xlu0 %143
  %vm145 = vcmask 7168
  %v146 = vsel %vm145, %v137, %v144
  %v147 = vperm.slane %v87, 3
  %v148 = vadd.f32 %v146, %v147
  %vm149 = vcmask 15360
  %150 = vst.msk [vmem:[%s3] sm:$0xff] %vm149, %v148
  // Predicated region
  $region14: #{tpu_custom_call.1} parent=0 // pred_check
    _
  $region15: #{tpu_custom_call.1} parent=0 // pred_check_branch
    %152 = sbr.rel (0) target = $region17
  $region16: #{tpu_custom_call.1} parent=0 // pred_region
    _
  $region17: #{tpu_custom_call.1} parent=0 // pred_fallthru
    _
  // Predicated region
  $region18: #{tpu_custom_call.1} parent=0 // pred_check
    _
  $region19: #{tpu_custom_call.1} parent=0 // pred_check_branch
    %154 = sbr.rel (0) target = $region21
  $region20: #{tpu_custom_call.1} parent=0 // pred_region
    _
  $region21: #{tpu_custom_call.1} parent=0 // pred_fallthru
    _

</llo_original>
